<compile_context>
chip_gen: v7x
topology: tpu7x:2x2x1
jax: 0.10.0
libtpu: 0.0.40
codegen_flags: <defaults>
</compile_context>

<pallas_src>
import functools
import math

import jax
import jax.numpy as jnp
from jax.experimental import pallas as pl
from jax.experimental.pallas import tpu as pltpu


def _round_up(x, m):
    return ((x + m - 1) // m) * m


def _vmem_capacity_bytes():
    try:
        return int(pltpu.get_tpu_info().vmem_capacity_bytes)
    except Exception:
        return 64 * 1024 * 1024  # conservative: v7x per-TensorCore VMEM


def _pick_tile(n, prefer, mult):
    """Largest multiple of `mult` <= prefer that divides n, else n (full extent)."""
    if n <= prefer:
        return n
    t = (prefer // mult) * mult
    while t >= mult:
        if n % t == 0:
            return t
        t -= mult
    return n


# ----------------------------- stage 1: fused Q/K/V projection -----------------------------

def _qkv_projection_kernel(xq_ref, xk_ref, xv_ref,
                           wqT_ref, wkT_ref, wvT_ref,
                           bq_ref, bk_ref, bv_ref,
                           q_out, k_out, v_out, *, compute_dtype):
    """Fused Q/K/V linear projections over a tile of flattened [B*L, D] rows."""
    cd = compute_dtype

    def _proj(x_ref, wT_ref, b_ref, o_ref):
        y = jnp.dot(x_ref[...].astype(cd), wT_ref[...],
                    preferred_element_type=jnp.float32) + b_ref[...]
        o_ref[...] = y.astype(o_ref.dtype)

    _proj(xq_ref, wqT_ref, bq_ref, q_out)
    _proj(xk_ref, wkT_ref, bk_ref, k_out)
    _proj(xv_ref, wvT_ref, bv_ref, v_out)


# ----------------------------- stage 2: attention kernel -----------------------------

def _shaw_attention_kernel(fm_ref, q_ref, k_ref, v_ref, ekT_ref, ev_ref,
                           woT_ref, bo_ref, o_ref,
                           q3_scr, t_scr, m_scr, l_scr, acc_scr, acc2_scr, ctx_scr,
                           *, n_heads, head_dim, num_rel, compute_dtype, approx_recip):
    cd = compute_dtype
    H, hd, R = n_heads, head_dim, num_rel
    tq = q_ref.shape[1]
    tk = k_ref.shape[1]
    ki = pl.program_id(2)

    def split_heads(x2d):
        # [n, H*hd] -> [H, n, hd]; static lane slices + leading-axis stack
        # (activations arrive lane-dense; heads are split in-register).
        return jnp.stack([x2d[:, h * hd:(h + 1) * hd] for h in range(H)], axis=0)

    # ---- per-(batch, q-tile) init: runs on the first kv tile only ----
    @pl.when(ki == 0)
    def _init():
        m_scr[...] = jnp.full((H, tq), -jnp.inf, dtype=jnp.float32)
        l_scr[...] = jnp.zeros((H, tq), dtype=jnp.float32)
        acc_scr[...] = jnp.zeros((H, tq, hd), dtype=jnp.float32)
        acc2_scr[...] = jnp.zeros((tq, H, R), dtype=jnp.float32)
        # 1/sqrt(head_dim) folded into Q (content and positional scores are linear in Q)
        q2 = (q_ref[0].astype(jnp.float32) * (1.0 / math.sqrt(hd))).astype(cd)
        q3 = split_heads(q2)                                            # [H, tq, hd]
        q3_scr[...] = q3
        # Shaw table trick: T[q, h, r] = Q[q, h, :] . emb_k[r, :]; the gathered
        # [tq, tk, hd] relative-key/value tensors are never materialized.
        t_hm = jnp.dot(q3.reshape(H * tq, hd), ekT_ref[...],
                       preferred_element_type=jnp.float32).reshape(H, tq, R)
        t_scr[...] = jnp.transpose(t_hm, (1, 0, 2)).astype(cd)          # q-major [tq, H, R]

    k3 = split_heads(k_ref[0].astype(cd))                               # [H, tk, hd]
    v3 = split_heads(v_ref[0].astype(cd))                               # [H, tk, hd]

    # content-content scores: one heads-batched MXU contraction
    attn1 = jax.lax.dot_general(q3_scr[...], k3, (((2,), (2,)), ((0,), (0,))),
                                preferred_element_type=jnp.float32)     # [H, tq, tk]

    # relative-position scores: one [tq, tk, R] one-hot consumed by MXU contractions
    rel = fm_ref[...]                                                   # [tq, tk] int32
    r_iota = jax.lax.broadcasted_iota(jnp.int32, (tq, tk, R), 2)
    onehot = (rel[:, :, None] == r_iota).astype(cd)                     # [tq, tk, R]
    attn2_q = jax.lax.dot_general(t_scr[...], onehot, (((2,), (2,)), ((0,), (0,))),
                                  preferred_element_type=jnp.float32)   # [tq, H, tk]
    logits = attn1 + jnp.transpose(attn2_q, (1, 0, 2))                  # [H, tq, tk]

    # online softmax over the kv tiles
    m_prev = m_scr[...]                                                 # [H, tq]
    m_new = jnp.maximum(m_prev, jnp.max(logits, axis=-1))
    alpha = jnp.exp(m_prev - m_new)                                     # [H, tq]
    p = jnp.exp(logits - m_new[:, :, None])                             # [H, tq, tk] f32
    l_scr[...] = alpha * l_scr[...] + jnp.sum(p, axis=-1)
    m_scr[...] = m_new
    # TODO(synk): dropout (training mode) and an attention-mask path are not implemented.

    p_cd = p.astype(cd)
    # content values: heads-batched MXU contraction
    w1 = jax.lax.dot_general(p_cd, v3, (((2,), (1,)), ((0,), (0,))),
                             preferred_element_type=jnp.float32)        # [H, tq, hd]
    acc_scr[...] = alpha[:, :, None] * acc_scr[...] + w1

    # attention mass per relative offset: single batched MXU contraction over keys
    p_qm = jnp.transpose(p_cd, (1, 0, 2))                               # [tq, H, tk]
    p_rel = jax.lax.dot_general(p_qm, onehot, (((2,), (1,)), ((0,), (0,))),
                                preferred_element_type=jnp.float32)     # [tq, H, R]
    alpha_qm = jnp.transpose(alpha)                                     # [tq, H]
    acc2_scr[...] = alpha_qm[:, :, None] * acc2_scr[...] + p_rel

    # ---- finalize on the last kv tile: normalize, add positional values, project ----
    @pl.when(ki == pl.num_programs(2) - 1)
    def _finalize():
        inv_l = pl.reciprocal(l_scr[...], approx=approx_recip)          # [H, tq]
        inv_l_qm = jnp.transpose(inv_l)                                 # [tq, H]
        # positional values: per-offset attention mass @ emb_v (one small MXU matmul)
        w2 = jnp.dot(acc2_scr[...].reshape(tq * H, R).astype(cd), ev_ref[...],
                     preferred_element_type=jnp.float32).reshape(tq, H, hd)
        # head-concat via static column stores, then a single [tq, D] @ [D, D] projection
        for h in range(H):
            ctx_h = (acc_scr[h] + w2[:, h, :]) * inv_l_qm[:, h:h + 1]   # [tq, hd] f32
            ctx_scr[:, h * hd:(h + 1) * hd] = ctx_h.astype(cd)
        out = jnp.dot(ctx_scr[...], woT_ref[...],
                      preferred_element_type=jnp.float32) + bo_ref[...]
        o_ref[0] = out.astype(o_ref.dtype)                              # lane-dense [tq, D]


# ----------------------------- wrapper -----------------------------

def multihead_attention_shaw(query, key, value, final_mat, params, n_heads,
                             *, compute_dtype=jnp.float32, q_tile=None, k_tile=None):
    B, L, D = query.shape
    assert key.shape == (B, L, D) and value.shape == (B, L, D)  # TODO(synk): Lq != Lk unsupported
    H = n_heads
    hd = D // H
    R = params["emb_k"].shape[0]
    cd = compute_dtype
    mult = 16 if cd == jnp.bfloat16 else 8                      # bf16 packs 16 sublanes/vreg

    vmem_cap = _vmem_capacity_bytes()
    big_vmem = vmem_cap >= 100 * 1024 * 1024                    # v5e/v6e (128 MiB) vs v7x (64 MiB)
    vmem_limit = int(min(vmem_cap * 3 // 4, 100 * 1024 * 1024))

    # ---------------- stage 1: fused Q/K/V projection over padded row tiles ----------------
    rows = B * L
    xq = query.reshape(rows, D)
    xk = key.reshape(rows, D)
    xv = value.reshape(rows, D)

    row_cap = 1024 if big_vmem else 512
    tr = min(row_cap, _round_up(rows, mult))
    rows_p = _round_up(rows, tr)
    if rows_p != rows:                                          # pad instead of whole-array block
        pad = ((0, rows_p - rows), (0, 0))
        xq, xk, xv = jnp.pad(xq, pad), jnp.pad(xk, pad), jnp.pad(xv, pad)

    # invariant operands pre-transposed and pre-cast to the compute dtype (no in-kernel casts)
    wqT = params["wq"].T.astype(cd)
    wkT = params["wk"].T.astype(cd)
    wvT = params["wv"].T.astype(cd)
    bq = params["bq"].reshape(1, D).astype(jnp.float32)
    bk = params["bk"].reshape(1, D).astype(jnp.float32)
    bv = params["bv"].reshape(1, D).astype(jnp.float32)

    row_spec = pl.BlockSpec((tr, D), lambda i: (i, 0))
    w_spec = pl.BlockSpec((D, D), lambda i: (0, 0))
    b_spec = pl.BlockSpec((1, D), lambda i: (0, 0))
    # TODO(synk): for very large D on 64 MiB parts, additionally tile the output/contraction
    # dims of the projection (3xD^2 weight blocks are the dominant VMEM term).

    Q2, K2, V2 = pl.pallas_call(
        functools.partial(_qkv_projection_kernel, compute_dtype=cd),
        grid=(rows_p // tr,),
        in_specs=[row_spec, row_spec, row_spec,
                  w_spec, w_spec, w_spec,
                  b_spec, b_spec, b_spec],
        out_specs=[row_spec, row_spec, row_spec],
        out_shape=[jax.ShapeDtypeStruct((rows_p, D), cd)] * 3,
        compiler_params=pltpu.CompilerParams(
            dimension_semantics=("parallel",),
            vmem_limit_bytes=vmem_limit),
    )(xq, xk, xv, wqT, wkT, wvT, bq, bk, bv)

    # lane-dense [B, L, D] activations straight into attention (pure metadata reshape;
    # no head-split transpose -> no extra HBM round trip).
    Q = Q2[:rows].reshape(B, L, D)
    K = K2[:rows].reshape(B, L, D)
    V = V2[:rows].reshape(B, L, D)

    # tiny relative-position tables; the [Lq, Lk, hd] gathers are never materialized.
    emb_kT = params["emb_k"].T.astype(cd)                       # [hd, R]
    emb_v = params["emb_v"].astype(cd)                          # [R, hd]
    woT = params["wo"].T.astype(cd)                             # [D, D], head-concat folded in
    bo = params["bo"].reshape(1, D).astype(jnp.float32)
    fm = final_mat.astype(jnp.int32)

    # ---------------- stage 2: attention, grid (batch, q tiles, kv tiles) ----------------
    tq = q_tile or _pick_tile(L, 256 if big_vmem else 128, mult)
    tk = k_tile or _pick_tile(L, 256 if big_vmem else 128, mult)
    nq, nk = L // tq, L // tk
    # NOTE(v7x megacore): both leading axes are "parallel"; B*nq >= 2 splits across the 2 TCs.

    kernel = functools.partial(_shaw_attention_kernel,
                               n_heads=H, head_dim=hd, num_rel=R, compute_dtype=cd,
                               approx_recip=(cd == jnp.bfloat16))

    in_specs = [
        pl.BlockSpec((tq, tk), lambda b, qi, ki: (qi, ki)),             # final_mat tile
        pl.BlockSpec((1, tq, D), lambda b, qi, ki: (b, qi, 0)),         # Q (lane-dense)
        pl.BlockSpec((1, tk, D), lambda b, qi, ki: (b, ki, 0)),         # K (lane-dense)
        pl.BlockSpec((1, tk, D), lambda b, qi, ki: (b, ki, 0)),         # V (lane-dense)
        pl.BlockSpec((hd, R), lambda b, qi, ki: (0, 0)),                # emb_k^T
        pl.BlockSpec((R, hd), lambda b, qi, ki: (0, 0)),                # emb_v
        pl.BlockSpec((D, D), lambda b, qi, ki: (0, 0)),                 # Wo^T
        pl.BlockSpec((1, D), lambda b, qi, ki: (0, 0)),                 # b_o
    ]
    out_spec = pl.BlockSpec((1, tq, D), lambda b, qi, ki: (b, qi, 0))

    out = pl.pallas_call(
        kernel,
        grid=(B, nq, nk),
        in_specs=in_specs,
        out_specs=out_spec,
        out_shape=jax.ShapeDtypeStruct((B, L, D), jnp.float32),
        scratch_shapes=[
            pltpu.VMEM((H, tq, hd), cd),            # head-split, scaled Q
            pltpu.VMEM((tq, H, R), cd),             # Shaw table T (q-major)
            pltpu.VMEM((H, tq), jnp.float32),       # online-softmax max
            pltpu.VMEM((H, tq), jnp.float32),       # online-softmax sum
            pltpu.VMEM((H, tq, hd), jnp.float32),   # content-value accumulator
            pltpu.VMEM((tq, H, R), jnp.float32),    # per-offset attention-mass accumulator
            pltpu.VMEM((tq, D), cd),                # concatenated-heads context
        ],
        compiler_params=pltpu.CompilerParams(
            dimension_semantics=("parallel", "parallel", "arbitrary"),
            vmem_limit_bytes=vmem_limit),
    )(fm, Q, K, V, emb_kT, emb_v, woT, bo)
    return out


# ----------------------------- pure-JAX reference -----------------------------

def reference(query, key, value, final_mat, params, n_heads):
    B, L, D = query.shape
    hd = D // n_heads
    Q = query @ params["wq"].T + params["bq"]
    K = key @ params["wk"].T + params["bk"]
    V = value @ params["wv"].T + params["bv"]
    r_q1 = Q.reshape(B, L, n_heads, hd).transpose(0, 2, 1, 3)
    r_k1 = K.reshape(B, L, n_heads, hd).transpose(0, 2, 3, 1)
    attn1 = r_q1 @ r_k1
    r_q2 = Q.reshape(B, L, n_heads, hd)
    r_k2 = params["emb_k"][final_mat]
    attn2 = jnp.einsum("bqhd,qkd->bhqk", r_q2, r_k2)
    attn = jax.nn.softmax((attn1 + attn2) / math.sqrt(hd), axis=-1)
    r_v1 = V.reshape(B, L, n_heads, hd).transpose(0, 2, 1, 3)
    w1 = attn @ r_v1
    r_v2 = params["emb_v"][final_mat]
    w2 = jnp.einsum("bhqk,qkd->bhqd", attn, r_v2)
    x = (w1 + w2).transpose(0, 2, 1, 3).reshape(B, L, D)
    return x @ params["wo"].T + params["bo"]


# ----------------------------- main -----------------------------

if __name__ == "__main__":
    B, L, HID, HEADS, MAX_P = 2, 8, 32, 4, 4
    HEAD_DIM = HID // HEADS

    key0 = jax.random.PRNGKey(0)
    ks = jax.random.split(key0, 12)

    def xavier(k, shape):
        fan_in, fan_out = shape[1], shape[0]
        bound = math.sqrt(6.0 / (fan_in + fan_out))
        return jax.random.uniform(k, shape, jnp.float32, -bound, bound)

    params = {
        "wq": xavier(ks[0], (HID, HID)), "bq": jnp.zeros((HID,), jnp.float32),
        "wk": xavier(ks[1], (HID, HID)), "bk": jnp.zeros((HID,), jnp.float32),
        "wv": xavier(ks[2], (HID, HID)), "bv": jnp.zeros((HID,), jnp.float32),
        "wo": xavier(ks[3], (HID, HID)), "bo": jnp.zeros((HID,), jnp.float32),
        "emb_k": xavier(ks[4], (2 * MAX_P + 1, HEAD_DIM)),
        "emb_v": xavier(ks[5], (2 * MAX_P + 1, HEAD_DIM)),
    }

    query = jax.random.normal(ks[6], (B, L, HID), jnp.float32)
    key_t = jax.random.normal(ks[7], (B, L, HID), jnp.float32)
    value = jax.random.normal(ks[8], (B, L, HID), jnp.float32)

    # Shaw relative-position index matrix: clip(k - q, -max_p, max_p) + max_p
    pos = jnp.arange(L)
    final_mat = (jnp.clip(pos[None, :] - pos[:, None], -MAX_P, MAX_P) + MAX_P).astype(jnp.int32)

    ref = reference(query, key_t, value, final_mat, params, HEADS)

    # f32 configuration (tight-precision check against the reference).
    out = multihead_attention_shaw(query, key_t, value, final_mat, params, HEADS,
                                   compute_dtype=jnp.float32)
    out = jax.block_until_ready(out)
    assert out.shape == (B, L, HID)
    assert jnp.allclose(out, ref, atol=5e-4, rtol=5e-4), "f32 kernel mismatch vs reference"

    # bf16 MXU-input configuration (f32 accumulation); loose sanity bound.
    out_bf16 = multihead_attention_shaw(query, key_t, value, final_mat, params, HEADS,
                                        compute_dtype=jnp.bfloat16)
    out_bf16 = jax.block_until_ready(out_bf16)
    assert bool(jnp.all(jnp.isfinite(out_bf16)))
    assert float(jnp.max(jnp.abs(out_bf16 - ref))) < 0.25, "bf16 kernel diverged from reference"

    print("KERNEL_OK")
</pallas_src>

<mosaic_0001>
module attributes {stable_mosaic.version = 11 : i64} {
  func.func @_qkv_projection_kernel(%arg0: i32, %arg1: memref<16x32xf32, #tpu.memory_space<vmem>>, %arg2: memref<16x32xf32, #tpu.memory_space<vmem>>, %arg3: memref<16x32xf32, #tpu.memory_space<vmem>>, %arg4: memref<32x32xf32, #tpu.memory_space<vmem>>, %arg5: memref<32x32xf32, #tpu.memory_space<vmem>>, %arg6: memref<32x32xf32, #tpu.memory_space<vmem>>, %arg7: memref<1x32xf32, #tpu.memory_space<vmem>>, %arg8: memref<1x32xf32, #tpu.memory_space<vmem>>, %arg9: memref<1x32xf32, #tpu.memory_space<vmem>>, %arg10: memref<16x32xf32, #tpu.memory_space<vmem>>, %arg11: memref<16x32xf32, #tpu.memory_space<vmem>>, %arg12: memref<16x32xf32, #tpu.memory_space<vmem>>) attributes {dimension_semantics = [#tpu.dimension_semantics<parallel>], iteration_bounds = array<i64: 1>, scalar_prefetch = 0 : i64, scratch_operands = 0 : i64, tpu.core_type = #tpu.core_type<tc>, window_params = [{transform_indices = @transform_0, window_bounds = array<i64: 16, 32>}, {transform_indices = @transform_1, window_bounds = array<i64: 16, 32>}, {transform_indices = @transform_2, window_bounds = array<i64: 16, 32>}, {pipeline_mode = #tpu.pipeline_mode<synchronous>, transform_indices = @transform_3, window_bounds = array<i64: 32, 32>}, {pipeline_mode = #tpu.pipeline_mode<synchronous>, transform_indices = @transform_4, window_bounds = array<i64: 32, 32>}, {pipeline_mode = #tpu.pipeline_mode<synchronous>, transform_indices = @transform_5, window_bounds = array<i64: 32, 32>}, {pipeline_mode = #tpu.pipeline_mode<synchronous>, transform_indices = @transform_6, window_bounds = array<i64: 1, 32>}, {pipeline_mode = #tpu.pipeline_mode<synchronous>, transform_indices = @transform_7, window_bounds = array<i64: 1, 32>}, {pipeline_mode = #tpu.pipeline_mode<synchronous>, transform_indices = @transform_8, window_bounds = array<i64: 1, 32>}, {transform_indices = @transform_9, window_bounds = array<i64: 16, 32>}, {transform_indices = @transform_10, window_bounds = array<i64: 16, 32>}, {transform_indices = @transform_11, window_bounds = array<i64: 16, 32>}]} {
    %c0 = arith.constant 0 : index
    %c0_0 = arith.constant 0 : index
    %0 = vector.load %arg1[%c0, %c0_0] : memref<16x32xf32, #tpu.memory_space<vmem>>, vector<16x32xf32>
    %c0_1 = arith.constant 0 : index
    %c0_2 = arith.constant 0 : index
    %1 = vector.load %arg4[%c0_1, %c0_2] : memref<32x32xf32, #tpu.memory_space<vmem>>, vector<32x32xf32>
    %cst = arith.constant dense<0.000000e+00> : vector<16x32xf32>
    %2 = tpu.matmul %0, %1, %cst {dimension_numbers = #tpu.dot_dimension_numbers<[1], [0], [0], [1], [0, 0, 1, 1], [], []>} : vector<16x32xf32>, vector<32x32xf32>, vector<16x32xf32> -> vector<16x32xf32>
    %c0_3 = arith.constant 0 : index
    %c0_4 = arith.constant 0 : index
    %3 = vector.load %arg7[%c0_3, %c0_4] : memref<1x32xf32, #tpu.memory_space<vmem>>, vector<1x32xf32>
    %4 = vector.broadcast %3 : vector<1x32xf32> to vector<16x32xf32>
    %5 = arith.addf %2, %4 : vector<16x32xf32>
    %c0_5 = arith.constant 0 : index
    %c0_6 = arith.constant 0 : index
    %6 = vector.load %arg10[%c0_5, %c0_6] : memref<16x32xf32, #tpu.memory_space<vmem>>, vector<16x32xf32>
    tpu.vector_store %arg10[%c0_5, %c0_6], %5 {strides = array<i32>} : memref<16x32xf32, #tpu.memory_space<vmem>>, vector<16x32xf32>,
    %c0_7 = arith.constant 0 : index
    %c0_8 = arith.constant 0 : index
    %7 = vector.load %arg2[%c0_7, %c0_8] : memref<16x32xf32, #tpu.memory_space<vmem>>, vector<16x32xf32>
    %c0_9 = arith.constant 0 : index
    %c0_10 = arith.constant 0 : index
    %8 = vector.load %arg5[%c0_9, %c0_10] : memref<32x32xf32, #tpu.memory_space<vmem>>, vector<32x32xf32>
    %cst_11 = arith.constant dense<0.000000e+00> : vector<16x32xf32>
    %9 = tpu.matmul %7, %8, %cst_11 {dimension_numbers = #tpu.dot_dimension_numbers<[1], [0], [0], [1], [0, 0, 1, 1], [], []>} : vector<16x32xf32>, vector<32x32xf32>, vector<16x32xf32> -> vector<16x32xf32>
    %c0_12 = arith.constant 0 : index
    %c0_13 = arith.constant 0 : index
    %10 = vector.load %arg8[%c0_12, %c0_13] : memref<1x32xf32, #tpu.memory_space<vmem>>, vector<1x32xf32>
    %11 = vector.broadcast %10 : vector<1x32xf32> to vector<16x32xf32>
    %12 = arith.addf %9, %11 : vector<16x32xf32>
    %c0_14 = arith.constant 0 : index
    %c0_15 = arith.constant 0 : index
    %13 = vector.load %arg11[%c0_14, %c0_15] : memref<16x32xf32, #tpu.memory_space<vmem>>, vector<16x32xf32>
    tpu.vector_store %arg11[%c0_14, %c0_15], %12 {strides = array<i32>} : memref<16x32xf32, #tpu.memory_space<vmem>>, vector<16x32xf32>,
    %c0_16 = arith.constant 0 : index
    %c0_17 = arith.constant 0 : index
    %14 = vector.load %arg3[%c0_16, %c0_17] : memref<16x32xf32, #tpu.memory_space<vmem>>, vector<16x32xf32>
    %c0_18 = arith.constant 0 : index
    %c0_19 = arith.constant 0 : index
    %15 = vector.load %arg6[%c0_18, %c0_19] : memref<32x32xf32, #tpu.memory_space<vmem>>, vector<32x32xf32>
    %cst_20 = arith.constant dense<0.000000e+00> : vector<16x32xf32>
    %16 = tpu.matmul %14, %15, %cst_20 {dimension_numbers = #tpu.dot_dimension_numbers<[1], [0], [0], [1], [0, 0, 1, 1], [], []>} : vector<16x32xf32>, vector<32x32xf32>, vector<16x32xf32> -> vector<16x32xf32>
    %c0_21 = arith.constant 0 : index
    %c0_22 = arith.constant 0 : index
    %17 = vector.load %arg9[%c0_21, %c0_22] : memref<1x32xf32, #tpu.memory_space<vmem>>, vector<1x32xf32>
    %18 = vector.broadcast %17 : vector<1x32xf32> to vector<16x32xf32>
    %19 = arith.addf %16, %18 : vector<16x32xf32>
    %c0_23 = arith.constant 0 : index
    %c0_24 = arith.constant 0 : index
    %20 = vector.load %arg12[%c0_23, %c0_24] : memref<16x32xf32, #tpu.memory_space<vmem>>, vector<16x32xf32>
    tpu.vector_store %arg12[%c0_23, %c0_24], %19 {strides = array<i32>} : memref<16x32xf32, #tpu.memory_space<vmem>>, vector<16x32xf32>,
    return
  }
  func.func @transform_0(%arg0: i32) -> (i32, i32) {
    %c0_i32 = arith.constant 0 : i32
    %c0_i32_0 = arith.constant 0 : i32
    return %arg0, %c0_i32 : i32, i32
  }
  func.func @transform_1(%arg0: i32) -> (i32, i32) {
    %c0_i32 = arith.constant 0 : i32
    %c0_i32_0 = arith.constant 0 : i32
    return %arg0, %c0_i32 : i32, i32
  }
  func.func @transform_2(%arg0: i32) -> (i32, i32) {
    %c0_i32 = arith.constant 0 : i32
    %c0_i32_0 = arith.constant 0 : i32
    return %arg0, %c0_i32 : i32, i32
  }
  func.func @transform_3(%arg0: i32) -> (i32, i32) {
    %c0_i32 = arith.constant 0 : i32
    %c0_i32_0 = arith.constant 0 : i32
    %c0_i32_1 = arith.constant 0 : i32
    return %c0_i32, %c0_i32_0 : i32, i32
  }
  func.func @transform_4(%arg0: i32) -> (i32, i32) {
    %c0_i32 = arith.constant 0 : i32
    %c0_i32_0 = arith.constant 0 : i32
    %c0_i32_1 = arith.constant 0 : i32
    return %c0_i32, %c0_i32_0 : i32, i32
  }
  func.func @transform_5(%arg0: i32) -> (i32, i32) {
    %c0_i32 = arith.constant 0 : i32
    %c0_i32_0 = arith.constant 0 : i32
    %c0_i32_1 = arith.constant 0 : i32
    return %c0_i32, %c0_i32_0 : i32, i32
  }
  func.func @transform_6(%arg0: i32) -> (i32, i32) {
    %c0_i32 = arith.constant 0 : i32
    %c0_i32_0 = arith.constant 0 : i32
    %c0_i32_1 = arith.constant 0 : i32
    return %c0_i32, %c0_i32_0 : i32, i32
  }
  func.func @transform_7(%arg0: i32) -> (i32, i32) {
    %c0_i32 = arith.constant 0 : i32
    %c0_i32_0 = arith.constant 0 : i32
    %c0_i32_1 = arith.constant 0 : i32
    return %c0_i32, %c0_i32_0 : i32, i32
  }
  func.func @transform_8(%arg0: i32) -> (i32, i32) {
    %c0_i32 = arith.constant 0 : i32
    %c0_i32_0 = arith.constant 0 : i32
    %c0_i32_1 = arith.constant 0 : i32
    return %c0_i32, %c0_i32_0 : i32, i32
  }
  func.func @transform_9(%arg0: i32) -> (i32, i32) {
    %c0_i32 = arith.constant 0 : i32
    %c0_i32_0 = arith.constant 0 : i32
    return %arg0, %c0_i32 : i32, i32
  }
  func.func @transform_10(%arg0: i32) -> (i32, i32) {
    %c0_i32 = arith.constant 0 : i32
    %c0_i32_0 = arith.constant 0 : i32
    return %arg0, %c0_i32 : i32, i32
  }
  func.func @transform_11(%arg0: i32) -> (i32, i32) {
    %c0_i32 = arith.constant 0 : i32
    %c0_i32_0 = arith.constant 0 : i32
    return %arg0, %c0_i32 : i32, i32
  }
}

</mosaic_0001>

<llo_original>
// kernel: tpu_custom_call.1
$region0: #{tpu_custom_call.1}
  #allocation0 [shape = 'u32[]', space=smem, size = 0x4, offset = 0x4, fixed_abs, tag = 'smem constant byte address 0x4 - core index']
  #allocation1 [shape = 'u32[144,128]{1,0:T(1,128)}', space=vmem, size = 0x12000, scoped, tag = 'internal scratch']
  %s0 = inlined_call_operand.hbm [shape: f32[16,32], index: 0, kind: input, shape index: {}]
  %s1 = inlined_call_operand.hbm [shape: f32[16,32], index: 1, kind: input, shape index: {}]
  %s2 = inlined_call_operand.hbm [shape: f32[16,32], index: 2, kind: input, shape index: {}]
  %s3 = inlined_call_operand.hbm [shape: f32[32,32], index: 3, kind: input, shape index: {}]
  %s4 = inlined_call_operand.hbm [shape: f32[32,32], index: 4, kind: input, shape index: {}]
  %s5 = inlined_call_operand.hbm [shape: f32[32,32], index: 5, kind: input, shape index: {}]
  %s6 = inlined_call_operand.vmem [shape: f32[1,32], index: 6, kind: input, shape index: {}]
  %s7 = inlined_call_operand.vmem [shape: f32[1,32], index: 7, kind: input, shape index: {}]
  %s8 = inlined_call_operand.vmem [shape: f32[1,32], index: 8, kind: input, shape index: {}]
  %s9 = inlined_call_operand.hbm [shape: f32[16,32], index: 9, kind: output, shape index: {0}]
  %s10 = inlined_call_operand.hbm [shape: f32[16,32], index: 10, kind: output, shape index: {1}]
  %s11 = inlined_call_operand.hbm [shape: f32[16,32], index: 11, kind: output, shape index: {2}]
  %12 = xla_tuple %s9, %s10, %s11
  %s13 = sld [smem:[#allocation0]]
  $region86: #{tpu_custom_call.1} parent=0
    _
  %s15 = ssub.s32 1, %s13
  %s16 = scalar_select 0, %s15, %s13
  $region1: #{tpu_custom_call.1} parent=0
    #allocation2 [shape = 'u8[8192]{0}', space=vmem, size = 0x2000, scoped, tag = 'input window, operand 0, single buffered']
    #allocation3 [shape = 's32[1]{0}', space=sflag, size = 0x4, scoped, tag = 'scoped memory for tpu_custom_call.1']
    #allocation4 [shape = 's32[1]{0}', space=sflag, size = 0x4, scoped, tag = 'scoped memory for tpu_custom_call.1']
    #allocation5 [shape = 'u8[8192]{0}', space=vmem, size = 0x2000, scoped, tag = 'input window, operand 1, single buffered']
    #allocation6 [shape = 's32[1]{0}', space=sflag, size = 0x4, scoped, tag = 'scoped memory for tpu_custom_call.1']
    #allocation7 [shape = 'u8[8192]{0}', space=vmem, size = 0x2000, scoped, tag = 'input window, operand 2, single buffered']
    #allocation8 [shape = 'u8[16384]{0}', space=vmem, size = 0x4000, scoped, tag = 'input window, operand 3, single buffered']
    #allocation9 [shape = 's32[1]{0}', space=sflag, size = 0x4, scoped, tag = 'scoped memory for tpu_custom_call.1']
    #allocation10 [shape = 'u8[16384]{0}', space=vmem, size = 0x4000, scoped, tag = 'input window, operand 4, single buffered']
    #allocation11 [shape = 'u8[16384]{0}', space=vmem, size = 0x4000, scoped, tag = 'input window, operand 5, single buffered']
    #allocation12 [shape = 's32[1]{0}', space=sflag, size = 0x4, scoped, tag = 'scoped memory for tpu_custom_call.1']
    #allocation13 [shape = 'u8[8192]{0}', space=vmem, size = 0x2000, scoped, tag = 'output window, operand 0, single buffered']
    #allocation14 [shape = 'u8[8192]{0}', space=vmem, size = 0x2000, scoped, tag = 'output window, operand 1, single buffered']
    #allocation15 [shape = 's32[1]{0}', space=sflag, size = 0x4, scoped, tag = 'scoped memory for tpu_custom_call.1']
    #allocation16 [shape = 'u8[8192]{0}', space=vmem, size = 0x2000, scoped, tag = 'output window, operand 2, single buffered']
    %17 = vsyncpa [#allocation3], 0
    %18 = vsyncpa [#allocation6], 0
    %19 = vsyncpa [#allocation9], 0
    %20 = vsyncpa [#allocation12], 0
    %21 = vsyncpa [#allocation4], 0
    %22 = vsyncpa [#allocation15], 0
    // Predicated region
    $region2: #{tpu_custom_call.1} parent=1 // pred_check
      _
    $region3: #{tpu_custom_call.1} parent=1 // pred_check_branch
      %24 = sbr.rel (0) target = $region5
    $region4: #{tpu_custom_call.1} parent=1 // pred_region
      %s26 = ssub.s32 256, 256
      %27 = vsyncadd [#allocation3], %s26
      %s28 = sshll.u32 [#allocation2], 4
      %s29 = int_to_ptr.vmem [resolvable:$true] %s28
      %34 = dma.hbm_to_vmem [thread:$0]  %s0, 256, %s29, [#allocation3], 128, 128, 8
    $region5: #{tpu_custom_call.1} parent=1 // pred_fallthru
      _
    // Predicated region
    $region6: #{tpu_custom_call.1} parent=1 // pred_check
      _
    $region7: #{tpu_custom_call.1} parent=1 // pred_check_branch
      %36 = sbr.rel (0) target = $region9
    $region8: #{tpu_custom_call.1} parent=1 // pred_region
      %s38 = ssub.s32 256, 256
      %39 = vsyncadd [#allocation6], %s38
      %s40 = sshll.u32 [#allocation5], 4
      %s41 = int_to_ptr.vmem [resolvable:$true] %s40
      %46 = dma.hbm_to_vmem [thread:$0]  %s1, 256, %s41, [#allocation6], 128, 128, 8
    $region9: #{tpu_custom_call.1} parent=1 // pred_fallthru
      _
    // Predicated region
    $region10: #{tpu_custom_call.1} parent=1 // pred_check
      _
    $region11: #{tpu_custom_call.1} parent=1 // pred_check_branch
      %48 = sbr.rel (0) target = $region13
    $region12: #{tpu_custom_call.1} parent=1 // pred_region
      %s50 = ssub.s32 256, 256
      %51 = vsyncadd [#allocation6], %s50
      %s52 = sshll.u32 [#allocation7], 4
      %s53 = int_to_ptr.vmem [resolvable:$true] %s52
      %58 = dma.hbm_to_vmem [thread:$0]  %s2, 256, %s53, [#allocation6], 128, 128, 8
    $region13: #{tpu_custom_call.1} parent=1 // pred_fallthru
      _
    // Predicated region
    $region14: #{tpu_custom_call.1} parent=1 // pred_check
      _
    $region15: #{tpu_custom_call.1} parent=1 // pred_check_branch
      %60 = sbr.rel (0) target = $region17
    $region16: #{tpu_custom_call.1} parent=1 // pred_region
      %s62 = ssub.s32 512, 512
      %63 = vsyncadd [#allocation9], %s62
      %s64 = sshll.u32 [#allocation8], 4
      %s65 = int_to_ptr.vmem [resolvable:$true] %s64
      %70 = dma.hbm_to_vmem [thread:$0]  %s3, 512, %s65, [#allocation9], 128, 128, 8
    $region17: #{tpu_custom_call.1} parent=1 // pred_fallthru
      _
    // Predicated region
    $region18: #{tpu_custom_call.1} parent=1 // pred_check
      _
    $region19: #{tpu_custom_call.1} parent=1 // pred_check_branch
      %72 = sbr.rel (0) target = $region21
    $region20: #{tpu_custom_call.1} parent=1 // pred_region
      %s74 = ssub.s32 512, 512
      %75 = vsyncadd [#allocation9], %s74
      %s76 = sshll.u32 [#allocation10], 4
      %s77 = int_to_ptr.vmem [resolvable:$true] %s76
      %82 = dma.hbm_to_vmem [thread:$0]  %s4, 512, %s77, [#allocation9], 128, 128, 8
    $region21: #{tpu_custom_call.1} parent=1 // pred_fallthru
      _
    // Predicated region
    $region22: #{tpu_custom_call.1} parent=1 // pred_check
      _
    $region23: #{tpu_custom_call.1} parent=1 // pred_check_branch
      %84 = sbr.rel (0) target = $region25
    $region24: #{tpu_custom_call.1} parent=1 // pred_region
      %s86 = ssub.s32 512, 512
      %87 = vsyncadd [#allocation12], %s86
      %s88 = sshll.u32 [#allocation11], 4
      %s89 = int_to_ptr.vmem [resolvable:$true] %s88
      %94 = dma.hbm_to_vmem [thread:$0]  %s5, 512, %s89, [#allocation12], 128, 128, 8
    $region25: #{tpu_custom_call.1} parent=1 // pred_fallthru
      _
    // Predicated region
    $region26: #{tpu_custom_call.1} parent=1 // pred_check
      _
    $region27: #{tpu_custom_call.1} parent=1 // pred_check_branch
      %96 = sbr.rel (0) target = $region29
    $region28: #{tpu_custom_call.1} parent=1 // pred_region
      _
    $region29: #{tpu_custom_call.1} parent=1 // pred_fallthru
      _
    // Predicated region
    $region30: #{tpu_custom_call.1} parent=1 // pred_check
      _
    $region31: #{tpu_custom_call.1} parent=1 // pred_check_branch
      %98 = sbr.rel (0) target = $region33
    $region32: #{tpu_custom_call.1} parent=1 // pred_region
      _
    $region33: #{tpu_custom_call.1} parent=1 // pred_fallthru
      _
    // Predicated region
    $region34: #{tpu_custom_call.1} parent=1 // pred_check
      _
    $region35: #{tpu_custom_call.1} parent=1 // pred_check_branch
      %100 = sbr.rel (0) target = $region37
    $region36: #{tpu_custom_call.1} parent=1 // pred_region
      _
    $region37: #{tpu_custom_call.1} parent=1 // pred_fallthru
      _
    // Predicated region
    $region38: #{tpu_custom_call.1} parent=1 // pred_check
      _
    $region39: #{tpu_custom_call.1} parent=1 // pred_check_branch
      %102 = sbr.rel (0) target = $region41
    $region40: #{tpu_custom_call.1} parent=1 // pred_region
      %103 = dma.done [#allocation3], 256
    $region41: #{tpu_custom_call.1} parent=1 // pred_fallthru
      _
    // Predicated region
    $region42: #{tpu_custom_call.1} parent=1 // pred_check
      _
    $region43: #{tpu_custom_call.1} parent=1 // pred_check_branch
      %105 = sbr.rel (0) target = $region45
    $region44: #{tpu_custom_call.1} parent=1 // pred_region
      %106 = dma.done [#allocation6], 256
    $region45: #{tpu_custom_call.1} parent=1 // pred_fallthru
      _
    // Predicated region
    $region46: #{tpu_custom_call.1} parent=1 // pred_check
      _
    $region47: #{tpu_custom_call.1} parent=1 // pred_check_branch
      %108 = sbr.rel (0) target = $region49
    $region48: #{tpu_custom_call.1} parent=1 // pred_region
      %109 = dma.done [#allocation6], 256
    $region49: #{tpu_custom_call.1} parent=1 // pred_fallthru
      _
    // Predicated region
    $region50: #{tpu_custom_call.1} parent=1 // pred_check
      _
    $region51: #{tpu_custom_call.1} parent=1 // pred_check_branch
      %111 = sbr.rel (0) target = $region53
    $region52: #{tpu_custom_call.1} parent=1 // pred_region
      %112 = dma.done [#allocation9], 512
    $region53: #{tpu_custom_call.1} parent=1 // pred_fallthru
      _
    // Predicated region
    $region54: #{tpu_custom_call.1} parent=1 // pred_check
      _
    $region55: #{tpu_custom_call.1} parent=1 // pred_check_branch
      %114 = sbr.rel (0) target = $region57
    $region56: #{tpu_custom_call.1} parent=1 // pred_region
      %115 = dma.done [#allocation9], 512
    $region57: #{tpu_custom_call.1} parent=1 // pred_fallthru
      _
    // Predicated region
    $region58: #{tpu_custom_call.1} parent=1 // pred_check
      _
    $region59: #{tpu_custom_call.1} parent=1 // pred_check_branch
      %117 = sbr.rel (0) target = $region61
    $region60: #{tpu_custom_call.1} parent=1 // pred_region
      %118 = dma.done [#allocation12], 512
    $region61: #{tpu_custom_call.1} parent=1 // pred_fallthru
      _
    %v119 = vld [vmem:[#allocation2] sm:$0xff]
    %v120 = vld [vmem:[#allocation2 + $0x8] sm:$0xff]
    %v121 = vld [vmem:[#allocation8] sm:$0xff]
    %v122 = vld [vmem:[#allocation8 + $0x8] sm:$0xff]
    %v123 = vld [vmem:[#allocation8 + $0x10] sm:$0xff]
    %v124 = vld [vmem:[#allocation8 + $0x18] sm:$0xff]
    %v125 = vld [vmem:[%s6] sm:$0x1]
    %v127 = vlaneseq
    %v128 = vshrl.u32 %v127, 7
    %v129 = vsub.s32 0, %v128
    %v130 = vrot.slane %v125, %v129
    %vm132 = vcmask 261120
    %v134 = vsel %vm132, %v119, 0
    %v137 = vsel %vm132, %v120, 0
    %139 = vmatprep.subr.mxu0 0.0
    %140 = vmatpush1.msra.mxu0 %v121
    %141 = vmatprep.subr.mxu0 0.0
    %142 = vmatpush1.msra.mxu0 %v122
    %143 = vmatprep.subr.mxu0 0.0
    %144 = vmatpush1.msra.mxu0 %v123
    %145 = vmatprep.subr.mxu0 0.0
    %146 = vmatpush1.msra.mxu0 %v124
    %147 = vmatprep.subr.mxu0 0.0
    %148 = vmatpush1.msra.mxu0 0.0
    %149 = vmatprep.subr.mxu0 0.0
    %150 = vmatpush1.msra.mxu0 0.0
    %151 = vmatprep.subr.mxu0 0.0
    %152 = vmatpush1.msra.mxu0 0.0
    %153 = vmatprep.subr.mxu0 0.0
    %154 = vmatpush1.msra.mxu0 0.0
    %155 = vmatprep.subr.mxu0 0.0
    %156 = vmatpush1.msra.mxu0 0.0
    %157 = vmatprep.subr.mxu0 0.0
    %158 = vmatpush1.msra.mxu0 0.0
    %159 = vmatprep.subr.mxu0 0.0
    %160 = vmatpush1.msra.mxu0 0.0
    %161 = vmatprep.subr.mxu0 0.0
    %162 = vmatpush1.msra.mxu0 0.0
    %163 = vmatprep.subr.mxu0 0.0
    %164 = vmatpush1.msra.mxu0 0.0
    %165 = vmatprep.subr.mxu0 0.0
    %166 = vmatpush1.msra.mxu0 0.0
    %167 = vmatprep.subr.mxu0 0.0
    %168 = vmatpush1.msra.mxu0 0.0
    %169 = vmatprep.subr.mxu0 0.0
    %170 = vmatpush1.msra.mxu0 0.0
    %171 = vmatprep.subr.mxu0 0.0
    %172 = vmatpush1.msra.mxu0 0.0
    %173 = vmatprep.subr.mxu0 0.0
    %174 = vmatpush1.msra.mxu0 0.0
    %175 = vmatprep.subr.mxu0 0.0
    %176 = vmatpush1.msra.mxu0 0.0
    %177 = vmatprep.subr.mxu0 0.0
    %178 = vmatpush1.msra.mxu0 0.0
    %179 = vmatprep.subr.mxu0 0.0
    %180 = vmatpush1.msra.mxu0 0.0
    %181 = vmatprep.subr.mxu0 0.0
    %182 = vmatpush1.msra.mxu0 0.0
    %183 = vmatprep.subr.mxu0 0.0
    %184 = vmatpush1.msra.mxu0 0.0
    %185 = vmatprep.subr.mxu0 0.0
    %186 = vmatpush1.msra.mxu0 0.0
    %187 = vmatprep.subr.mxu0 0.0
    %188 = vmatpush1.msra.mxu0 0.0
    %189 = vmatprep.subr.mxu0 0.0
    %190 = vmatpush1.msra.mxu0 0.0
    %191 = vmatprep.subr.mxu0 0.0
    %192 = vmatpush1.msra.mxu0 0.0
    %193 = vmatprep.subr.mxu0 0.0
    %194 = vmatpush1.msra.mxu0 0.0
    %195 = vmatprep.subr.mxu0 0.0
    %196 = vmatpush1.msra.mxu0 0.0
    %197 = vmatprep.subr.mxu0 0.0
    %198 = vmatpush1.msra.mxu0 0.0
    %199 = vmatprep.subr.mxu0 0.0
    %200 = vmatpush1.msra.mxu0 0.0
    %201 = vmatprep.subr.mxu0 0.0
    %202 = vmatpush1.msra.mxu0 0.0
    %203 = vmatprep.mubr.f32.mxu0 0.0
    %204 = vmatmul.mubr.f32.gmra.mrb[0].mxu0 %v134
    %v205 = vpop.f32.mrb[0].mxu0
    %v206 = vadd.f32 %v130, %v205
    %v207 = vpop.f32.mrb[0].mxu0
    %208 = vmatprep.mubr.f32.mxu0 0.0
    %209 = vmatmul.mubr.f32.gmra.mrb[0].mxu0 %v137
    %v210 = vpop.f32.mrb[0].mxu0
    %v211 = vadd.f32 %v130, %v210
    %v212 = vpop.f32.mrb[0].mxu0
    %213 = vdwg.mxu0
    %214 = vst.msk [vmem:[#allocation13] sm:$0xff] %vm132, %v206
    %215 = vst.msk [vmem:[#allocation13 + $0x8] sm:$0xff] %vm132, %v211
    %v216 = vld [vmem:[#allocation5] sm:$0xff]
    %v217 = vld [vmem:[#allocation5 + $0x8] sm:$0xff]
    %v218 = vld [vmem:[#allocation10] sm:$0xff]
    %v219 = vld [vmem:[#allocation10 + $0x8] sm:$0xff]
    %v220 = vld [vmem:[#allocation10 + $0x10] sm:$0xff]
    %v221 = vld [vmem:[#allocation10 + $0x18] sm:$0xff]
    %v222 = vld [vmem:[%s7] sm:$0x1]
    %v224 = vlaneseq
    %v225 = vshrl.u32 %v224, 7
    %v226 = vsub.s32 0, %v225
    %v227 = vrot.slane %v222, %v226
    %v230 = vsel %vm132, %v216, 0
    %v233 = vsel %vm132, %v217, 0
    %235 = vmatprep.subr.mxu0 0.0
    %236 = vmatpush1.msra.mxu0 %v218
    %237 = vmatprep.subr.mxu0 0.0
    %238 = vmatpush1.msra.mxu0 %v219
    %239 = vmatprep.subr.mxu0 0.0
    %240 = vmatpush1.msra.mxu0 %v220
    %241 = vmatprep.subr.mxu0 0.0
    %242 = vmatpush1.msra.mxu0 %v221
    %243 = vmatprep.subr.mxu0 0.0
    %244 = vmatpush1.msra.mxu0 0.0
    %245 = vmatprep.subr.mxu0 0.0
    %246 = vmatpush1.msra.mxu0 0.0
    %247 = vmatprep.subr.mxu0 0.0
    %248 = vmatpush1.msra.mxu0 0.0
    %249 = vmatprep.subr.mxu0 0.0
    %250 = vmatpush1.msra.mxu0 0.0
    %251 = vmatprep.subr.mxu0 0.0
    %252 = vmatpush1.msra.mxu0 0.0
    %253 = vmatprep.subr.mxu0 0.0
    %254 = vmatpush1.msra.mxu0 0.0
    %255 = vmatprep.subr.mxu0 0.0
    %256 = vmatpush1.msra.mxu0 0.0
    %257 = vmatprep.subr.mxu0 0.0
    %258 = vmatpush1.msra.mxu0 0.0
    %259 = vmatprep.subr.mxu0 0.0
    %260 = vmatpush1.msra.mxu0 0.0
    %261 = vmatprep.subr.mxu0 0.0
    %262 = vmatpush1.msra.mxu0 0.0
    %263 = vmatprep.subr.mxu0 0.0
    %264 = vmatpush1.msra.mxu0 0.0
    %265 = vmatprep.subr.mxu0 0.0
    %266 = vmatpush1.msra.mxu0 0.0
    %267 = vmatprep.subr.mxu0 0.0
    %268 = vmatpush1.msra.mxu0 0.0
    %269 = vmatprep.subr.mxu0 0.0
    %270 = vmatpush1.msra.mxu0 0.0
    %271 = vmatprep.subr.mxu0 0.0
    %272 = vmatpush1.msra.mxu0 0.0
    %273 = vmatprep.subr.mxu0 0.0
    %274 = vmatpush1.msra.mxu0 0.0
    %275 = vmatprep.subr.mxu0 0.0
    %276 = vmatpush1.msra.mxu0 0.0
    %277 = vmatprep.subr.mxu0 0.0
    %278 = vmatpush1.msra.mxu0 0.0
    %279 = vmatprep.subr.mxu0 0.0
    %280 = vmatpush1.msra.mxu0 0.0
    %281 = vmatprep.subr.mxu0 0.0
    %282 = vmatpush1.msra.mxu0 0.0
    %283 = vmatprep.subr.mxu0 0.0
    %284 = vmatpush1.msra.mxu0 0.0
    %285 = vmatprep.subr.mxu0 0.0
    %286 = vmatpush1.msra.mxu0 0.0
    %287 = vmatprep.subr.mxu0 0.0
    %288 = vmatpush1.msra.mxu0 0.0
    %289 = vmatprep.subr.mxu0 0.0
    %290 = vmatpush1.msra.mxu0 0.0
    %291 = vmatprep.subr.mxu0 0.0
    %292 = vmatpush1.msra.mxu0 0.0
    %293 = vmatprep.subr.mxu0 0.0
    %294 = vmatpush1.msra.mxu0 0.0
    %295 = vmatprep.subr.mxu0 0.0
    %296 = vmatpush1.msra.mxu0 0.0
    %297 = vmatprep.subr.mxu0 0.0
    %298 = vmatpush1.msra.mxu0 0.0
    %299 = vmatprep.mubr.f32.mxu0 0.0
    %300 = vmatmul.mubr.f32.gmra.mrb[0].mxu0 %v230
    %v301 = vpop.f32.mrb[0].mxu0
    %v302 = vadd.f32 %v227, %v301
    %v303 = vpop.f32.mrb[0].mxu0
    %304 = vmatprep.mubr.f32.mxu0 0.0
    %305 = vmatmul.mubr.f32.gmra.mrb[0].mxu0 %v233
    %v306 = vpop.f32.mrb[0].mxu0
    %v307 = vadd.f32 %v227, %v306
    %v308 = vpop.f32.mrb[0].mxu0
    %309 = vdwg.mxu0
    %310 = vst.msk [vmem:[#allocation14] sm:$0xff] %vm132, %v302
    %311 = vst.msk [vmem:[#allocation14 + $0x8] sm:$0xff] %vm132, %v307
    %v312 = vld [vmem:[#allocation7] sm:$0xff]
    %v313 = vld [vmem:[#allocation7 + $0x8] sm:$0xff]
    %v314 = vld [vmem:[#allocation11] sm:$0xff]
    %v315 = vld [vmem:[#allocation11 + $0x8] sm:$0xff]
    %v316 = vld [vmem:[#allocation11 + $0x10] sm:$0xff]
    %v317 = vld [vmem:[#allocation11 + $0x18] sm:$0xff]
    %v318 = vld [vmem:[%s8] sm:$0x1]
    %v320 = vlaneseq
    %v321 = vshrl.u32 %v320, 7
    %v322 = vsub.s32 0, %v321
    %v323 = vrot.slane %v318, %v322
    %v326 = vsel %vm132, %v312, 0
    %v329 = vsel %vm132, %v313, 0
    %331 = vmatprep.subr.mxu0 0.0
    %332 = vmatpush1.msra.mxu0 %v314
    %333 = vmatprep.subr.mxu0 0.0
    %334 = vmatpush1.msra.mxu0 %v315
    %335 = vmatprep.subr.mxu0 0.0
    %336 = vmatpush1.msra.mxu0 %v316
    %337 = vmatprep.subr.mxu0 0.0
    %338 = vmatpush1.msra.mxu0 %v317
    %339 = vmatprep.subr.mxu0 0.0
    %340 = vmatpush1.msra.mxu0 0.0
    %341 = vmatprep.subr.mxu0 0.0
    %342 = vmatpush1.msra.mxu0 0.0
    %343 = vmatprep.subr.mxu0 0.0
    %344 = vmatpush1.msra.mxu0 0.0
    %345 = vmatprep.subr.mxu0 0.0
    %346 = vmatpush1.msra.mxu0 0.0
    %347 = vmatprep.subr.mxu0 0.0
    %348 = vmatpush1.msra.mxu0 0.0
    %349 = vmatprep.subr.mxu0 0.0
    %350 = vmatpush1.msra.mxu0 0.0
    %351 = vmatprep.subr.mxu0 0.0
    %352 = vmatpush1.msra.mxu0 0.0
    %353 = vmatprep.subr.mxu0 0.0
    %354 = vmatpush1.msra.mxu0 0.0
    %355 = vmatprep.subr.mxu0 0.0
    %356 = vmatpush1.msra.mxu0 0.0
    %357 = vmatprep.subr.mxu0 0.0
    %358 = vmatpush1.msra.mxu0 0.0
    %359 = vmatprep.subr.mxu0 0.0
    %360 = vmatpush1.msra.mxu0 0.0
    %361 = vmatprep.subr.mxu0 0.0
    %362 = vmatpush1.msra.mxu0 0.0
    %363 = vmatprep.subr.mxu0 0.0
    %364 = vmatpush1.msra.mxu0 0.0
    %365 = vmatprep.subr.mxu0 0.0
    %366 = vmatpush1.msra.mxu0 0.0
    %367 = vmatprep.subr.mxu0 0.0
    %368 = vmatpush1.msra.mxu0 0.0
    %369 = vmatprep.subr.mxu0 0.0
    %370 = vmatpush1.msra.mxu0 0.0
    %371 = vmatprep.subr.mxu0 0.0
    %372 = vmatpush1.msra.mxu0 0.0
    %373 = vmatprep.subr.mxu0 0.0
    %374 = vmatpush1.msra.mxu0 0.0
    %375 = vmatprep.subr.mxu0 0.0
    %376 = vmatpush1.msra.mxu0 0.0
    %377 = vmatprep.subr.mxu0 0.0
    %378 = vmatpush1.msra.mxu0 0.0
    %379 = vmatprep.subr.mxu0 0.0
    %380 = vmatpush1.msra.mxu0 0.0
    %381 = vmatprep.subr.mxu0 0.0
    %382 = vmatpush1.msra.mxu0 0.0
    %383 = vmatprep.subr.mxu0 0.0
    %384 = vmatpush1.msra.mxu0 0.0
    %385 = vmatprep.subr.mxu0 0.0
    %386 = vmatpush1.msra.mxu0 0.0
    %387 = vmatprep.subr.mxu0 0.0
    %388 = vmatpush1.msra.mxu0 0.0
    %389 = vmatprep.subr.mxu0 0.0
    %390 = vmatpush1.msra.mxu0 0.0
    %391 = vmatprep.subr.mxu0 0.0
    %392 = vmatpush1.msra.mxu0 0.0
    %393 = vmatprep.subr.mxu0 0.0
    %394 = vmatpush1.msra.mxu0 0.0
    %395 = vmatprep.mubr.f32.mxu0 0.0
    %396 = vmatmul.mubr.f32.gmra.mrb[0].mxu0 %v326
    %v397 = vpop.f32.mrb[0].mxu0
    %v398 = vadd.f32 %v323, %v397
    %v399 = vpop.f32.mrb[0].mxu0
    %400 = vmatprep.mubr.f32.mxu0 0.0
    %401 = vmatmul.mubr.f32.gmra.mrb[0].mxu0 %v329
    %v402 = vpop.f32.mrb[0].mxu0
    %v403 = vadd.f32 %v323, %v402
    %v404 = vpop.f32.mrb[0].mxu0
    %405 = vdwg.mxu0
    %406 = vst.msk [vmem:[#allocation16] sm:$0xff] %vm132, %v398
    %407 = vst.msk [vmem:[#allocation16 + $0x8] sm:$0xff] %vm132, %v403
    // Predicated region
    $region62: #{tpu_custom_call.1} parent=1 // pred_check
      _
    $region63: #{tpu_custom_call.1} parent=1 // pred_check_branch
      %409 = sbr.rel (0) target = $region65
    $region64: #{tpu_custom_call.1} parent=1 // pred_region
      %s411 = ssub.s32 256, 256
      %412 = vsyncadd [#allocation4], %s411
      %s413 = sshll.u32 [#allocation13], 4
      %s414 = int_to_ptr.vmem [resolvable:$true] %s413
      %419 = dma.vmem_to_hbm [thread:$0]  %s414, 256, %s9, [#allocation4], 128, 128, 8
    $region65: #{tpu_custom_call.1} parent=1 // pred_fallthru
      _
    // Predicated region
    $region66: #{tpu_custom_call.1} parent=1 // pred_check
      _
    $region67: #{tpu_custom_call.1} parent=1 // pred_check_branch
      %421 = sbr.rel (0) target = $region69
    $region68: #{tpu_custom_call.1} parent=1 // pred_region
      %s423 = ssub.s32 256, 256
      %424 = vsyncadd [#allocation15], %s423
      %s425 = sshll.u32 [#allocation14], 4
      %s426 = int_to_ptr.vmem [resolvable:$true] %s425
      %431 = dma.vmem_to_hbm [thread:$0]  %s426, 256, %s10, [#allocation15], 128, 128, 8
    $region69: #{tpu_custom_call.1} parent=1 // pred_fallthru
      _
    // Predicated region
    $region70: #{tpu_custom_call.1} parent=1 // pred_check
      _
    $region71: #{tpu_custom_call.1} parent=1 // pred_check_branch
      %433 = sbr.rel (0) target = $region73
    $region72: #{tpu_custom_call.1} parent=1 // pred_region
      %s435 = ssub.s32 256, 256
      %436 = vsyncadd [#allocation15], %s435
      %s437 = sshll.u32 [#allocation16], 4
      %s438 = int_to_ptr.vmem [resolvable:$true] %s437
      %443 = dma.vmem_to_hbm [thread:$0]  %s438, 256, %s11, [#allocation15], 128, 128, 8
    $region73: #{tpu_custom_call.1} parent=1 // pred_fallthru
      _
    // Predicated region
    $region74: #{tpu_custom_call.1} parent=1 // pred_check
      _
    $region75: #{tpu_custom_call.1} parent=1 // pred_check_branch
      %445 = sbr.rel (0) target = $region77
    $region76: #{tpu_custom_call.1} parent=1 // pred_region
      %446 = dma.done [#allocation4], 256
    $region77: #{tpu_custom_call.1} parent=1 // pred_fallthru
      _
    // Predicated region
    $region78: #{tpu_custom_call.1} parent=1 // pred_check
      _
    $region79: #{tpu_custom_call.1} parent=1 // pred_check_branch
      %448 = sbr.rel (0) target = $region81
    $region80: #{tpu_custom_call.1} parent=1 // pred_region
      %449 = dma.done [#allocation15], 256
    $region81: #{tpu_custom_call.1} parent=1 // pred_fallthru
      _
    // Predicated region
    $region82: #{tpu_custom_call.1} parent=1 // pred_check
      _
    $region83: #{tpu_custom_call.1} parent=1 // pred_check_branch
      %451 = sbr.rel (0) target = $region85
    $region84: #{tpu_custom_call.1} parent=1 // pred_region
      %452 = dma.done [#allocation15], 256
    $region85: #{tpu_custom_call.1} parent=1 // pred_fallthru
      _
    %453 = vsyncpa [#allocation3], 1
    %454 = vsyncpa [#allocation6], 1
    %455 = vsyncpa [#allocation9], 1
    %456 = vsyncpa [#allocation12], 1
    %457 = vsyncpa [#allocation4], 1
    %458 = vsyncpa [#allocation15], 1

</llo_original>
